<compile_context>
chip_gen: v6e
topology: v6e:2x2x1
jax: 0.10.0
libtpu: 0.0.40
codegen_flags: <defaults>
</compile_context>

<pallas_src>
import jax
import jax.numpy as jnp
from jax.experimental import pallas as pl
from jax.experimental.pallas import tpu as pltpu


def _round_up(x, m):
    return ((x + m - 1) // m) * m


def _cdiv(a, b):
    return (a + b - 1) // b


# ----------------------------- kernels --------------------------------------

def _mlp_resident_kernel(x_ref, w1_ref, b1_ref, w2_ref, b2_ref, o_ref):
    """Fused Linear -> ReLU -> Linear for one row tile; weights fully resident."""
    h = jnp.dot(x_ref[...], w1_ref[...], preferred_element_type=jnp.float32)
    h = jnp.maximum(h + b1_ref[...], 0.0)                 # f32 epilogue on VPU
    o_ref[...] = (jnp.dot(h.astype(w2_ref.dtype), w2_ref[...],
                          preferred_element_type=jnp.float32)
                  + b2_ref[...]).astype(o_ref.dtype)


def _mlp_streaming_kernel(x_ref, w1_ref, b1_ref, w2_ref, b2_ref, o_ref):
    """Hidden-dim streamed fallback: partial sums accumulated directly in the
    (f32, resident across the hidden grid axis) output block -- no scratch."""
    h_idx = pl.program_id(1)

    @pl.when(h_idx == 0)
    def _init():
        o_ref[...] = jnp.zeros_like(o_ref)

    h = jnp.dot(x_ref[...], w1_ref[...], preferred_element_type=jnp.float32)
    h = jnp.maximum(h + b1_ref[...], 0.0)
    o_ref[...] += jnp.dot(h.astype(w2_ref.dtype), w2_ref[...],
                          preferred_element_type=jnp.float32)

    @pl.when(h_idx == pl.num_programs(1) - 1)
    def _finalize():
        o_ref[...] += b2_ref[...]


# ------------------------- wrapper / preprocessing --------------------------

def prepare_params(params, compute_dtype=jnp.bfloat16):
    """One-time weight preprocessing: cast to the MXU compute dtype (bf16 is
    native on v5e/v6e/v7x) and zero-pad to lane-dense multiples of 128.
    Padding is exact: zero W1 columns + zero b1 -> ReLU gives 0 -> no W2
    contribution; zero W1/W2 rows only ever meet zero-padded inputs/hiddens."""
    w1, b1, w2, b2 = params
    D, H = w1.shape
    E = w2.shape[1]
    Dp, Hp, Ep = _round_up(D, 128), _round_up(H, 128), _round_up(E, 128)
    w1_p = jnp.pad(w1.astype(compute_dtype), ((0, Dp - D), (0, Hp - H)))
    w2_p = jnp.pad(w2.astype(compute_dtype), ((0, Hp - H), (0, Ep - E)))
    b1_p = jnp.pad(b1.reshape(1, H).astype(jnp.float32), ((0, 0), (0, Hp - H)))
    b2_p = jnp.pad(b2.reshape(1, E).astype(jnp.float32), ((0, 0), (0, Ep - E)))
    return dict(w1=w1_p, b1=b1_p, w2=w2_p, b2=b2_p,
                D=D, H=H, E=E, Dp=Dp, Hp=Hp, Ep=Ep,
                compute_dtype=jnp.dtype(compute_dtype))


def _vmem_limit(footprint_bytes):
    """Footprint-based VMEM request with headroom, capped below physical VMEM."""
    try:
        phys = pltpu.get_tpu_info().vmem_capacity_bytes
    except Exception:
        phys = 64 * 1024 * 1024          # v7x has the smallest per-core VMEM
    cap = int(phys * 0.85)               # leave room for Mosaic scratch/spill
    limit = min(max(footprint_bytes + (8 << 20), 32 << 20), cap)
    return max(limit, footprint_bytes + (2 << 20))


def mainmodel_forward(data, prepared, label=None, *, tm_max=256, th=512,
                      weight_resident_bytes=16 * 1024 * 1024,
                      force_streaming=False):
    """Pallas equivalent of MainModel.forward(data, label=None).

    prepared: output of prepare_params() (raw (w1,b1,w2,b2) also accepted).
    tm_max:   max row tile (multiple of 16); actual tile chosen adaptively.
    th:       hidden tile for the streaming fallback (multiple of 128;
              default 512 keeps the 256-wide v6e/v7x MXU filled).
    """
    if label is not None:
        # TODO(synk): label branch uses the injected trainfunc __L__
        # (e.g. AAM-softmax loss + prec1); only the label=None path is kernelized.
        raise NotImplementedError("label path (__L__) not implemented")

    if isinstance(prepared, (tuple, list)):
        prepared = prepare_params(prepared)

    assert tm_max % 16 == 0 and th % 128 == 0

    w1_p, b1_p = prepared["w1"], prepared["b1"]
    w2_p, b2_p = prepared["w2"], prepared["b2"]
    D, Dp = prepared["D"], prepared["Dp"]
    Hp = prepared["Hp"]
    E, Ep = prepared["E"], prepared["Ep"]
    cdt = prepared["compute_dtype"]

    # data.reshape(-1, data.size()[-1])
    x = data.reshape(-1, data.shape[-1]).astype(cdt)
    N = x.shape[0]
    assert x.shape[1] == D

    # ---- adaptive row tiling: >=2 tiles whenever there is enough work (so the
    # 'parallel' row axis populates both v7x TensorCores); padding waste < 1 tile.
    n_row_tiles = 1 if N <= 16 else max(2, _cdiv(N, tm_max))
    tm = min(_round_up(_cdiv(N, n_row_tiles), 16), tm_max)
    Np = _round_up(N, tm)
    row_tiles = Np // tm

    if Np != N or Dp != D:
        x = jnp.pad(x, ((0, Np - N), (0, Dp - D)))

    w_bytes = (w1_p.size * w1_p.dtype.itemsize
               + w2_p.size * w2_p.dtype.itemsize)
    resident = (not force_streaming) and (w_bytes <= weight_resident_bytes)
    flops = 2 * Np * (Dp * Hp + Hp * Ep)

    if resident:
        footprint = (2 * tm * Dp * x.dtype.itemsize      # x double buffer
                     + 2 * w_bytes                       # weight buffers
                     + 2 * (Hp + Ep) * 4                 # biases
                     + 2 * tm * Ep * 4)                  # output double buffer
        bytes_accessed = (x.size * x.dtype.itemsize + w_bytes
                          + (Hp + Ep) * 4 + Np * Ep * 4)
        out = pl.pallas_call(
            _mlp_resident_kernel,
            out_shape=jax.ShapeDtypeStruct((Np, Ep), jnp.float32),
            grid_spec=pltpu.PrefetchScalarGridSpec(
                num_scalar_prefetch=0,
                grid=(row_tiles,),
                in_specs=[
                    pl.BlockSpec((tm, Dp), lambda i: (i, 0)),   # x row tile
                    pl.BlockSpec((Dp, Hp), lambda i: (0, 0)),   # W1 resident
                    pl.BlockSpec((1, Hp), lambda i: (0, 0)),    # b1 resident
                    pl.BlockSpec((Hp, Ep), lambda i: (0, 0)),   # W2 resident
                    pl.BlockSpec((1, Ep), lambda i: (0, 0)),    # b2 resident
                ],
                out_specs=pl.BlockSpec((tm, Ep), lambda i: (i, 0)),
            ),
            compiler_params=pltpu.CompilerParams(
                dimension_semantics=("parallel",),
                vmem_limit_bytes=_vmem_limit(footprint),
            ),
            cost_estimate=pl.CostEstimate(flops=flops, transcendentals=0,
                                          bytes_accessed=bytes_accessed),
        )(x, w1_p, b1_p, w2_p, b2_p)
    else:
        # Streaming fallback: tile the hidden dim, serpentine sweep so the
        # weight slab at each row-tile boundary is reused.
        th = min(th, Hp)
        while Hp % th:
            th -= 128
        n_h = Hp // th

        def _serp(i, h):
            return jnp.where(i % 2 == 0, h, n_h - 1 - h)

        footprint = (2 * tm * Dp * x.dtype.itemsize
                     + 2 * Dp * th * w1_p.dtype.itemsize
                     + 2 * th * Ep * w2_p.dtype.itemsize
                     + 2 * (th + Ep) * 4
                     + 2 * tm * Ep * 4)
        bytes_accessed = (x.size * x.dtype.itemsize
                          + row_tiles * (w_bytes + Hp * 4)   # weights re-streamed
                          + Ep * 4 + Np * Ep * 4)
        out = pl.pallas_call(
            _mlp_streaming_kernel,
            out_shape=jax.ShapeDtypeStruct((Np, Ep), jnp.float32),
            grid_spec=pltpu.PrefetchScalarGridSpec(
                num_scalar_prefetch=0,
                grid=(row_tiles, n_h),
                in_specs=[
                    pl.BlockSpec((tm, Dp), lambda i, h: (i, 0)),
                    pl.BlockSpec((Dp, th), lambda i, h: (0, _serp(i, h))),
                    pl.BlockSpec((1, th), lambda i, h: (0, _serp(i, h))),
                    pl.BlockSpec((th, Ep), lambda i, h: (_serp(i, h), 0)),
                    pl.BlockSpec((1, Ep), lambda i, h: (0, 0)),
                ],
                out_specs=pl.BlockSpec((tm, Ep), lambda i, h: (i, 0)),
            ),
            compiler_params=pltpu.CompilerParams(
                dimension_semantics=("parallel", "arbitrary"),
                vmem_limit_bytes=_vmem_limit(footprint),
            ),
            cost_estimate=pl.CostEstimate(flops=flops, transcendentals=0,
                                          bytes_accessed=bytes_accessed),
        )(x, w1_p, b1_p, w2_p, b2_p)

    return out[:N, :E]


# ----------------------------- demo / test -----------------------------------

def _init_params(key, d_in, d_hidden, d_out, dtype=jnp.float32):
    """Deterministic synthetic encoder parameters (Kaiming-ish scale)."""
    k1, k2, k3, k4 = jax.random.split(key, 4)
    w1 = jax.random.normal(k1, (d_in, d_hidden), dtype) * (2.0 / d_in) ** 0.5
    b1 = jax.random.normal(k2, (1, d_hidden), dtype) * 0.01
    w2 = jax.random.normal(k3, (d_hidden, d_out), dtype) * (2.0 / d_hidden) ** 0.5
    b2 = jax.random.normal(k4, (1, d_out), dtype) * 0.01
    return w1, b1, w2, b2


def _reference_forward(data, params):
    """Pure-JAX reference for the same forward (correctness check)."""
    w1, b1, w2, b2 = params
    x = data.reshape(-1, data.shape[-1])
    h = jnp.maximum(x @ w1 + b1, 0.0)
    return h @ w2 + b2


if __name__ == "__main__":
    key = jax.random.PRNGKey(0)
    k_data, k_param = jax.random.split(key)

    # Small demo shapes chosen to exercise the padding paths:
    #   feat=120 -> Dp=128, hidden=200 -> Hp=256, embed=192 -> Ep=256,
    #   rows = 2*150 = 300 -> two 160-row tiles (adaptive tm, <1 tile padding).
    batch, seq, feat = 2, 150, 120
    hidden, embed = 200, 192
    data = jax.random.normal(k_data, (batch, seq, feat), jnp.float32)
    params = _init_params(k_param, feat, hidden, embed)
    ref = _reference_forward(data, params)

    # f32 compute, resident weights: tight correctness check.
    prep_f32 = prepare_params(params, compute_dtype=jnp.float32)
    out_f32 = jax.block_until_ready(mainmodel_forward(data, prep_f32))
    assert out_f32.shape == (batch * seq, embed)
    assert jnp.allclose(out_f32, ref, atol=1e-4, rtol=1e-4)

    # bf16 compute (default: MXU-native on v5e/v6e/v7x), resident weights.
    prep_bf16 = prepare_params(params)
    out_bf16 = jax.block_until_ready(mainmodel_forward(data, prep_bf16))
    assert out_bf16.shape == (batch * seq, embed)
    assert jnp.allclose(out_bf16, ref, atol=1e-1, rtol=1e-1)

    # Streaming (hidden-reduction) fallback, forced with a small th so the
    # serpentine weight sweep + in-place o_ref accumulation are exercised.
    out_stream = jax.block_until_ready(
        mainmodel_forward(data, prep_f32, th=128, force_streaming=True))
    assert jnp.allclose(out_stream, ref, atol=1e-4, rtol=1e-4)

    print("KERNEL_OK")
</pallas_src>

<mosaic_0001>
module attributes {stable_mosaic.version = 11 : i64} {
  func.func @_mlp_resident_kernel(%arg0: i32, %arg1: memref<160x128xf32, #tpu.memory_space<vmem>>, %arg2: memref<128x256xf32, #tpu.memory_space<vmem>>, %arg3: memref<1x256xf32, #tpu.memory_space<vmem>>, %arg4: memref<256x256xf32, #tpu.memory_space<vmem>>, %arg5: memref<1x256xf32, #tpu.memory_space<vmem>>, %arg6: memref<160x256xf32, #tpu.memory_space<vmem>>) attributes {dimension_semantics = [#tpu.dimension_semantics<parallel>], iteration_bounds = array<i64: 2>, scalar_prefetch = 0 : i64, scratch_operands = 0 : i64, tpu.core_type = #tpu.core_type<tc>, window_params = [{transform_indices = @transform_0, window_bounds = array<i64: 160, 128>}, {pipeline_mode = #tpu.pipeline_mode<synchronous>, transform_indices = @transform_1, window_bounds = array<i64: 128, 256>}, {pipeline_mode = #tpu.pipeline_mode<synchronous>, transform_indices = @transform_2, window_bounds = array<i64: 1, 256>}, {pipeline_mode = #tpu.pipeline_mode<synchronous>, transform_indices = @transform_3, window_bounds = array<i64: 256, 256>}, {pipeline_mode = #tpu.pipeline_mode<synchronous>, transform_indices = @transform_4, window_bounds = array<i64: 1, 256>}, {transform_indices = @transform_5, window_bounds = array<i64: 160, 256>}]} {
    %c0 = arith.constant 0 : index
    %c0_0 = arith.constant 0 : index
    %0 = vector.load %arg1[%c0, %c0_0] : memref<160x128xf32, #tpu.memory_space<vmem>>, vector<160x128xf32>
    %c0_1 = arith.constant 0 : index
    %c0_2 = arith.constant 0 : index
    %1 = vector.load %arg2[%c0_1, %c0_2] : memref<128x256xf32, #tpu.memory_space<vmem>>, vector<128x256xf32>
    %cst = arith.constant dense<0.000000e+00> : vector<160x256xf32>
    %2 = tpu.matmul %0, %1, %cst {dimension_numbers = #tpu.dot_dimension_numbers<[1], [0], [0], [1], [0, 0, 1, 1], [], []>} : vector<160x128xf32>, vector<128x256xf32>, vector<160x256xf32> -> vector<160x256xf32>
    %c0_3 = arith.constant 0 : index
    %c0_4 = arith.constant 0 : index
    %3 = vector.load %arg3[%c0_3, %c0_4] : memref<1x256xf32, #tpu.memory_space<vmem>>, vector<1x256xf32>
    %4 = vector.broadcast %3 : vector<1x256xf32> to vector<160x256xf32>
    %5 = arith.addf %2, %4 : vector<160x256xf32>
    %cst_5 = arith.constant 0.000000e+00 : f32
    %6 = vector.broadcast %cst_5 : f32 to vector<160x256xf32>
    %7 = arith.maximumf %5, %6 : vector<160x256xf32>
    %c0_6 = arith.constant 0 : index
    %c0_7 = arith.constant 0 : index
    %8 = vector.load %arg4[%c0_6, %c0_7] : memref<256x256xf32, #tpu.memory_space<vmem>>, vector<256x256xf32>
    %cst_8 = arith.constant dense<0.000000e+00> : vector<160x256xf32>
    %9 = tpu.matmul %7, %8, %cst_8 {dimension_numbers = #tpu.dot_dimension_numbers<[1], [0], [0], [1], [0, 0, 1, 1], [], []>} : vector<160x256xf32>, vector<256x256xf32>, vector<160x256xf32> -> vector<160x256xf32>
    %c0_9 = arith.constant 0 : index
    %c0_10 = arith.constant 0 : index
    %10 = vector.load %arg5[%c0_9, %c0_10] : memref<1x256xf32, #tpu.memory_space<vmem>>, vector<1x256xf32>
    %11 = vector.broadcast %10 : vector<1x256xf32> to vector<160x256xf32>
    %12 = arith.addf %9, %11 : vector<160x256xf32>
    %c0_11 = arith.constant 0 : index
    %c0_12 = arith.constant 0 : index
    %13 = vector.load %arg6[%c0_11, %c0_12] : memref<160x256xf32, #tpu.memory_space<vmem>>, vector<160x256xf32>
    tpu.vector_store %arg6[%c0_11, %c0_12], %12 {strides = array<i32>} : memref<160x256xf32, #tpu.memory_space<vmem>>, vector<160x256xf32>,
    return
  }
  func.func @transform_0(%arg0: i32) -> (i32, i32) {
    %c0_i32 = arith.constant 0 : i32
    %c0_i32_0 = arith.constant 0 : i32
    return %arg0, %c0_i32 : i32, i32
  }
  func.func @transform_1(%arg0: i32) -> (i32, i32) {
    %c0_i32 = arith.constant 0 : i32
    %c0_i32_0 = arith.constant 0 : i32
    %c0_i32_1 = arith.constant 0 : i32
    return %c0_i32, %c0_i32_0 : i32, i32
  }
  func.func @transform_2(%arg0: i32) -> (i32, i32) {
    %c0_i32 = arith.constant 0 : i32
    %c0_i32_0 = arith.constant 0 : i32
    %c0_i32_1 = arith.constant 0 : i32
    return %c0_i32, %c0_i32_0 : i32, i32
  }
  func.func @transform_3(%arg0: i32) -> (i32, i32) {
    %c0_i32 = arith.constant 0 : i32
    %c0_i32_0 = arith.constant 0 : i32
    %c0_i32_1 = arith.constant 0 : i32
    return %c0_i32, %c0_i32_0 : i32, i32
  }
  func.func @transform_4(%arg0: i32) -> (i32, i32) {
    %c0_i32 = arith.constant 0 : i32
    %c0_i32_0 = arith.constant 0 : i32
    %c0_i32_1 = arith.constant 0 : i32
    return %c0_i32, %c0_i32_0 : i32, i32
  }
  func.func @transform_5(%arg0: i32) -> (i32, i32) {
    %c0_i32 = arith.constant 0 : i32
    %c0_i32_0 = arith.constant 0 : i32
    return %arg0, %c0_i32 : i32, i32
  }
}

</mosaic_0001>

<llo_original>
// kernel: tpu_custom_call.1
$region0: #{tpu_custom_call.1}
  #allocation0 [shape = 'u32[]', space=smem, size = 0x4, offset = 0x4, fixed_abs, tag = 'smem constant byte address 0x4 - core index']
  #allocation1 [shape = 'u32[144,128]{1,0:T(1,128)}', space=vmem, size = 0x12000, scoped, tag = 'internal scratch']
  %s0 = inlined_call_operand.hbm [shape: f32[320,128], index: 0, kind: input, shape index: {}]
  %s1 = inlined_call_operand.hbm [shape: f32[128,256], index: 1, kind: input, shape index: {}]
  %s2 = inlined_call_operand.vmem [shape: f32[1,256], index: 2, kind: input, shape index: {}]
  %s3 = inlined_call_operand.hbm [shape: f32[256,256], index: 3, kind: input, shape index: {}]
  %s4 = inlined_call_operand.vmem [shape: f32[1,256], index: 4, kind: input, shape index: {}]
  %s5 = inlined_call_operand.hbm [shape: f32[320,256], index: 5, kind: output, shape index: {}]
  %s6 = sld [smem:[#allocation0]]
  $region65: #{tpu_custom_call.1} parent=0
    _
  %s8 = ssub.s32 1, %s6
  %s9 = scalar_select 0, %s8, %s6
  $region1: #{tpu_custom_call.1} parent=0
    #allocation2 [shape = 'u8[163840]{0}', space=vmem, size = 0x28000, scoped, tag = 'input window, operand 0']
    #allocation3 [shape = 's32[2]{0}', space=sflag, size = 0x8, scoped, tag = 'scoped memory for tpu_custom_call.1']
    #allocation4 [shape = 's32[2]{0}', space=sflag, size = 0x8, scoped, tag = 'scoped memory for tpu_custom_call.1']
    #allocation5 [shape = 'u8[131072]{0}', space=vmem, size = 0x20000, scoped, tag = 'input window, operand 1, single buffered']
    #allocation6 [shape = 's32[1]{0}', space=sflag, size = 0x4, scoped, tag = 'scoped memory for tpu_custom_call.1']
    #allocation7 [shape = 'u8[262144]{0}', space=vmem, size = 0x40000, scoped, tag = 'input window, operand 3, single buffered']
    #allocation8 [shape = 'u8[327680]{0}', space=vmem, size = 0x50000, scoped, tag = 'output window, operand 0']
    %10 = vsyncpa [#allocation3], 0
    %s11 = scalar_lea.sflag [#allocation3], 1
    %12 = vsyncpa %s11, 0
    %13 = vsyncpa [#allocation6], 0
    %14 = vsyncpa [#allocation4], 0
    %s15 = scalar_lea.sflag [#allocation4], 1
    %16 = vsyncpa %s15, 0
    loop: start=0, step=1, limit=4
    $region2: #{tpu_custom_call.1} parent=1 // loop_pre_header
      _
    $region3: #{tpu_custom_call.1} parent=1 // loop_header
      %s18 = sphi 0, %s22
      %p19 = scmp.ge.s32.totalorder %s18, 4
      %s28 = sphi 0, %s30
      %s31 = sphi 0, %s28
      %s32 = sphi 0, %s31
      %s48 = sphi 0, %s32
      %s52 = sphi 0, %s52
      %s54 = sphi 0, %s52
      %s55 = sphi 0, %s54
      %s69 = sphi 0, %s55
      %s73 = sphi 0, %s73
      %s75 = sphi 0, %s73
      %s76 = sphi 0, %s75
      %s90 = sphi 0, %s76
      %s94 = sphi 0, %s94
      %s96 = sphi 0, %s94
      %s97 = sphi 0, %s96
      %s111 = sphi 0, %s97
      %s115 = sphi 0, %s115
      %s117 = sphi 0, %s115
      %s118 = sphi 0, %s117
      %s132 = sphi 0, %s118
      %s138 = sphi 0, %s140
      %s141 = sphi 0, %s138
      %s142 = sphi 0, %s141
      %s158 = sphi 0, %s142
    $region4: #{tpu_custom_call.1} parent=1 // loop_header_branch
      %21 = sbr.rel (%p19) target = $region8
    $region5: #{tpu_custom_call.1} parent=1 // loop_body
      %s23 = ssub.s32 %s18, 1
      %s24 = ssub.s32 %s18, 2
      %s25 = sadd.s32 %s18, 1
      %s26 = ssub.s32 %s18, %s25
      %p27 = scmp.eq.s32.totalorder %s26, 0
      %s29 = sadd.s32 %s28, 1
      %s30 = scalar_select %p27, %s28, %s29
      %p33 = pneg %p27
      %p34 = scmp.eq.s32.totalorder %s18, 1
      %p35 = por %p33, %p34
      %p36 = scmp.ne.s32.totalorder %s28, %s31
      %p37 = scmp.eq.s32.totalorder %s18, 0
      %p38 = por %p36, %p37
      %p39 = scmp.ne.s32.totalorder %s28, %s31
      %p40 = scmp.eq.s32.totalorder %s23, 1
      %p41 = por %p39, %p40
      %p42 = scmp.ne.s32.totalorder %s31, %s32
      %p43 = scmp.eq.s32.totalorder %s23, 0
      %p44 = por %p42, %p43
      %p45 = scmp.ne.s32.totalorder %s31, %s32
      %p46 = scmp.eq.s32.totalorder %s24, 1
      %p47 = por %p45, %p46
      %p49 = scmp.ne.s32.totalorder %s32, %s48
      %p50 = scmp.eq.s32.totalorder %s24, 0
      %p51 = por %p49, %p50
      %s53 = sadd.s32 %s52, 1
      %p56 = scmp.eq.s32.totalorder %s18, 1
      %p57 = scmp.ne.s32.totalorder %s52, %s54
      %p58 = scmp.eq.s32.totalorder %s18, 0
      %p59 = por %p57, %p58
      %p60 = scmp.ne.s32.totalorder %s52, %s54
      %p61 = scmp.eq.s32.totalorder %s23, 1
      %p62 = por %p60, %p61
      %p63 = scmp.ne.s32.totalorder %s54, %s55
      %p64 = scmp.eq.s32.totalorder %s23, 0
      %p65 = por %p63, %p64
      %p66 = scmp.ne.s32.totalorder %s54, %s55
      %p67 = scmp.eq.s32.totalorder %s24, 1
      %p68 = por %p66, %p67
      %p70 = scmp.ne.s32.totalorder %s55, %s69
      %p71 = scmp.eq.s32.totalorder %s24, 0
      %p72 = por %p70, %p71
      %s74 = sadd.s32 %s73, 1
      %p77 = scmp.eq.s32.totalorder %s18, 1
      %p78 = scmp.ne.s32.totalorder %s73, %s75
      %p79 = scmp.eq.s32.totalorder %s18, 0
      %p80 = por %p78, %p79
      %p81 = scmp.ne.s32.totalorder %s73, %s75
      %p82 = scmp.eq.s32.totalorder %s23, 1
      %p83 = por %p81, %p82
      %p84 = scmp.ne.s32.totalorder %s75, %s76
      %p85 = scmp.eq.s32.totalorder %s23, 0
      %p86 = por %p84, %p85
      %p87 = scmp.ne.s32.totalorder %s75, %s76
      %p88 = scmp.eq.s32.totalorder %s24, 1
      %p89 = por %p87, %p88
      %p91 = scmp.ne.s32.totalorder %s76, %s90
      %p92 = scmp.eq.s32.totalorder %s24, 0
      %p93 = por %p91, %p92
      %s95 = sadd.s32 %s94, 1
      %p98 = scmp.eq.s32.totalorder %s18, 1
      %p99 = scmp.ne.s32.totalorder %s94, %s96
      %p100 = scmp.eq.s32.totalorder %s18, 0
      %p101 = por %p99, %p100
      %p102 = scmp.ne.s32.totalorder %s94, %s96
      %p103 = scmp.eq.s32.totalorder %s23, 1
      %p104 = por %p102, %p103
      %p105 = scmp.ne.s32.totalorder %s96, %s97
      %p106 = scmp.eq.s32.totalorder %s23, 0
      %p107 = por %p105, %p106
      %p108 = scmp.ne.s32.totalorder %s96, %s97
      %p109 = scmp.eq.s32.totalorder %s24, 1
      %p110 = por %p108, %p109
      %p112 = scmp.ne.s32.totalorder %s97, %s111
      %p113 = scmp.eq.s32.totalorder %s24, 0
      %p114 = por %p112, %p113
      %s116 = sadd.s32 %s115, 1
      %p119 = scmp.eq.s32.totalorder %s18, 1
      %p120 = scmp.ne.s32.totalorder %s115, %s117
      %p121 = scmp.eq.s32.totalorder %s18, 0
      %p122 = por %p120, %p121
      %p123 = scmp.ne.s32.totalorder %s115, %s117
      %p124 = scmp.eq.s32.totalorder %s23, 1
      %p125 = por %p123, %p124
      %p126 = scmp.ne.s32.totalorder %s117, %s118
      %p127 = scmp.eq.s32.totalorder %s23, 0
      %p128 = por %p126, %p127
      %p129 = scmp.ne.s32.totalorder %s117, %s118
      %p130 = scmp.eq.s32.totalorder %s24, 1
      %p131 = por %p129, %p130
      %p133 = scmp.ne.s32.totalorder %s118, %s132
      %p134 = scmp.eq.s32.totalorder %s24, 0
      %p135 = por %p133, %p134
      %s136 = ssub.s32 %s18, %s25
      %p137 = scmp.eq.s32.totalorder %s136, 0
      %s139 = sadd.s32 %s138, 1
      %s140 = scalar_select %p137, %s138, %s139
      %p143 = pneg %p137
      %p144 = scmp.eq.s32.totalorder %s18, 1
      %p145 = por %p143, %p144
      %p146 = scmp.ne.s32.totalorder %s138, %s141
      %p147 = scmp.eq.s32.totalorder %s18, 0
      %p148 = por %p146, %p147
      %p149 = scmp.ne.s32.totalorder %s138, %s141
      %p150 = scmp.eq.s32.totalorder %s23, 1
      %p151 = por %p149, %p150
      %p152 = scmp.ne.s32.totalorder %s141, %s142
      %p153 = scmp.eq.s32.totalorder %s23, 0
      %p154 = por %p152, %p153
      %p155 = scmp.ne.s32.totalorder %s141, %s142
      %p156 = scmp.eq.s32.totalorder %s24, 1
      %p157 = por %p155, %p156
      %p159 = scmp.ne.s32.totalorder %s142, %s158
      %p160 = scmp.eq.s32.totalorder %s24, 0
      %p161 = por %p159, %p160
      %p162 = scmp.le.s32.totalorder 1, %s18
      %p163 = scmp.lt.s32.totalorder %s18, 3
      %p164 = pnand %p162, %p163
      %p165 = pneg %p164
      // Predicated region
      $region9: #{tpu_custom_call.1} parent=5 // pred_check
        _
      $region10: #{tpu_custom_call.1} parent=5 // pred_check_branch
        %167 = sbr.rel (%p164) target = $region12
      $region11: #{tpu_custom_call.1} parent=5 // pred_region
        %s168 = ssub.s32 %s18, 1
        // Predicated region
        $region13: #{tpu_custom_call.1} parent=11 // pred_check
          %p169 = pneg %p65
        $region14: #{tpu_custom_call.1} parent=11 // pred_check_branch
          %171 = sbr.rel (%p169) target = $region16
        $region15: #{tpu_custom_call.1} parent=11 // pred_region
          %s173 = ssub.s32 4096, 4096
          %174 = vsyncadd [#allocation6], %s173
          %s175 = sshll.u32 [#allocation5], 4
          %s176 = int_to_ptr.vmem [resolvable:$true] %s175
          %181 = dma.hbm_to_vmem [thread:$0]  %s1, 4096, %s176, [#allocation6], 256, 256, 16
        $region16: #{tpu_custom_call.1} parent=11 // pred_fallthru
          _
        // Predicated region
        $region17: #{tpu_custom_call.1} parent=11 // pred_check
          %p182 = pneg %p86
        $region18: #{tpu_custom_call.1} parent=11 // pred_check_branch
          %184 = sbr.rel (%p182) target = $region20
        $region19: #{tpu_custom_call.1} parent=11 // pred_region
          _
        $region20: #{tpu_custom_call.1} parent=11 // pred_fallthru
          _
        // Predicated region
        $region21: #{tpu_custom_call.1} parent=11 // pred_check
          %p185 = pneg %p107
        $region22: #{tpu_custom_call.1} parent=11 // pred_check_branch
          %187 = sbr.rel (%p185) target = $region24
        $region23: #{tpu_custom_call.1} parent=11 // pred_region
          %s189 = ssub.s32 8192, 8192
          %190 = vsyncadd [#allocation6], %s189
          %s191 = sshll.u32 [#allocation7], 4
          %s192 = int_to_ptr.vmem [resolvable:$true] %s191
          %197 = dma.hbm_to_vmem [thread:$0]  %s3, 8192, %s192, [#allocation6], 256, 256, 16
        $region24: #{tpu_custom_call.1} parent=11 // pred_fallthru
          _
        // Predicated region
        $region25: #{tpu_custom_call.1} parent=11 // pred_check
          %p198 = pneg %p128
        $region26: #{tpu_custom_call.1} parent=11 // pred_check_branch
          %200 = sbr.rel (%p198) target = $region28
        $region27: #{tpu_custom_call.1} parent=11 // pred_region
          _
        $region28: #{tpu_custom_call.1} parent=11 // pred_fallthru
          _
      $region12: #{tpu_custom_call.1} parent=5 // pred_fallthru
        _
      %p201 = scmp.lt.s32.totalorder %s18, 2
      // Predicated region
      $region29: #{tpu_custom_call.1} parent=5 // pred_check
        %p202 = pneg %p201
      $region30: #{tpu_custom_call.1} parent=5 // pred_check_branch
        %204 = sbr.rel (%p202) target = $region32
      $region31: #{tpu_custom_call.1} parent=5 // pred_region
        // Predicated region
        $region33: #{tpu_custom_call.1} parent=31 // pred_check
          %p205 = pneg %p38
        $region34: #{tpu_custom_call.1} parent=31 // pred_check_branch
          %207 = sbr.rel (%p205) target = $region36
        $region35: #{tpu_custom_call.1} parent=31 // pred_region
          %s208 = sand.u32 %s28, 1
          %s209 = scalar_lea.sflag [#allocation3], %s208
          %s210 = sand.u32 %s28, 1
          %s211 = smul.addr %s210, 160
          %s212 = scalar_lea.vmem [#allocation2], %s211
          %s213 = smul.u32 20, %s18
          %s215 = ssub.s32 2560, 2560
          %216 = vsyncadd %s209, %s215
          %s217 = smul.addr %s213, 128
          %s218 = scalar_lea.hbm %s0, %s217
          %s219 = sshll.u32 %s212, 4
          %s220 = int_to_ptr.vmem [resolvable:$true] %s219
          %225 = dma.hbm_to_vmem [thread:$0]  %s218, 2560, %s220, %s209, 128, 128, 8
        $region36: #{tpu_custom_call.1} parent=31 // pred_fallthru
          _
      $region32: #{tpu_custom_call.1} parent=5 // pred_fallthru
        _
      %p226 = scmp.le.s32.totalorder 1, %s18
      %p227 = scmp.lt.s32.totalorder %s18, 3
      %p228 = pnand %p226, %p227
      %p229 = pneg %p228
      // Predicated region
      $region37: #{tpu_custom_call.1} parent=5 // pred_check
        _
      $region38: #{tpu_custom_call.1} parent=5 // pred_check_branch
        %231 = sbr.rel (%p228) target = $region40
      $region39: #{tpu_custom_call.1} parent=5 // pred_region
        %s232 = ssub.s32 %s18, 1
        %s233 = sand.u32 %s31, 1
        %s234 = scalar_lea.sflag [#allocation3], %s233
        %s235 = sand.u32 %s31, 1
        %s236 = smul.addr %s235, 160
        %s237 = scalar_lea.vmem [#allocation2], %s236
        // Predicated region
        $region41: #{tpu_custom_call.1} parent=39 // pred_check
          %p238 = pneg %p44
        $region42: #{tpu_custom_call.1} parent=39 // pred_check_branch
          %240 = sbr.rel (%p238) target = $region44
        $region43: #{tpu_custom_call.1} parent=39 // pred_region
          %241 = dma.done %s234, 2560
        $region44: #{tpu_custom_call.1} parent=39 // pred_fallthru
          _
        // Predicated region
        $region45: #{tpu_custom_call.1} parent=39 // pred_check
          %p242 = pneg %p65
        $region46: #{tpu_custom_call.1} parent=39 // pred_check_branch
          %244 = sbr.rel (%p242) target = $region48
        $region47: #{tpu_custom_call.1} parent=39 // pred_region
          %245 = dma.done [#allocation6], 4096
        $region48: #{tpu_custom_call.1} parent=39 // pred_fallthru
          _
        // Predicated region
        $region49: #{tpu_custom_call.1} parent=39 // pred_check
          %p246 = pneg %p107
        $region50: #{tpu_custom_call.1} parent=39 // pred_check_branch
          %248 = sbr.rel (%p246) target = $region52
        $region51: #{tpu_custom_call.1} parent=39 // pred_region
          %249 = dma.done [#allocation6], 8192
        $region52: #{tpu_custom_call.1} parent=39 // pred_fallthru
          _
        %s250 = sand.u32 %s31, 1
        %s251 = scalar_lea.sflag [#allocation3], %s250
        %s252 = sand.u32 %s31, 1
        %s253 = smul.addr %s252, 160
        %s254 = scalar_lea.vmem [#allocation2], %s253
        %p255 = pneg %p44
        %p256 = pneg %p41
        %p257 = pneg %p65
        %p258 = pneg %p62
        %p259 = pneg %p86
        %p260 = pneg %p83
        %p261 = pneg %p107
        %p262 = pneg %p104
        %p263 = pneg %p128
        %p264 = pneg %p125
        %p265 = pneg %p154
        %p266 = pneg %p151
        %s267 = sand.u32 %s141, 1
        %s268 = scalar_lea.sflag [#allocation4], %s267
        %s269 = sand.u32 %s141, 1
        %s270 = smul.addr %s269, 320
        %s271 = scalar_lea.vmem [#allocation8], %s270
        %s272 = smul.u32 20, %s23
        %s273 = smul.u32 20, %s23
        %v274 = vld [vmem:[%s237] sm:$0xff]
        %v275 = vld [vmem:[%s237 + $0x8] sm:$0xff]
        %v276 = vld [vmem:[%s237 + $0x10] sm:$0xff]
        %v277 = vld [vmem:[%s237 + $0x18] sm:$0xff]
        %v278 = vld [vmem:[%s237 + $0x20] sm:$0xff]
        %v279 = vld [vmem:[%s237 + $0x28] sm:$0xff]
        %v280 = vld [vmem:[%s237 + $0x30] sm:$0xff]
        %v281 = vld [vmem:[%s237 + $0x38] sm:$0xff]
        %v282 = vld [vmem:[%s237 + $0x40] sm:$0xff]
        %v283 = vld [vmem:[%s237 + $0x48] sm:$0xff]
        %v284 = vld [vmem:[%s237 + $0x50] sm:$0xff]
        %v285 = vld [vmem:[%s237 + $0x58] sm:$0xff]
        %v286 = vld [vmem:[%s237 + $0x60] sm:$0xff]
        %v287 = vld [vmem:[%s237 + $0x68] sm:$0xff]
        %v288 = vld [vmem:[%s237 + $0x70] sm:$0xff]
        %v289 = vld [vmem:[%s237 + $0x78] sm:$0xff]
        %v290 = vld [vmem:[%s237 + $0x80] sm:$0xff]
        %v291 = vld [vmem:[%s237 + $0x88] sm:$0xff]
        %v292 = vld [vmem:[%s237 + $0x90] sm:$0xff]
        %v293 = vld [vmem:[%s237 + $0x98] sm:$0xff]
        %v294 = vld [vmem:[#allocation5] sm:$0xff]
        %v295 = vld [vmem:[#allocation5 + $0x8] sm:$0xff]
        %v296 = vld [vmem:[#allocation5 + $0x10] sm:$0xff]
        %v297 = vld [vmem:[#allocation5 + $0x18] sm:$0xff]
        %v298 = vld [vmem:[#allocation5 + $0x20] sm:$0xff]
        %v299 = vld [vmem:[#allocation5 + $0x28] sm:$0xff]
        %v300 = vld [vmem:[#allocation5 + $0x30] sm:$0xff]
        %v301 = vld [vmem:[#allocation5 + $0x38] sm:$0xff]
        %v302 = vld [vmem:[#allocation5 + $0x40] sm:$0xff]
        %v303 = vld [vmem:[#allocation5 + $0x48] sm:$0xff]
        %v304 = vld [vmem:[#allocation5 + $0x50] sm:$0xff]
        %v305 = vld [vmem:[#allocation5 + $0x58] sm:$0xff]
        %v306 = vld [vmem:[#allocation5 + $0x60] sm:$0xff]
        %v307 = vld [vmem:[#allocation5 + $0x68] sm:$0xff]
        %v308 = vld [vmem:[#allocation5 + $0x70] sm:$0xff]
        %v309 = vld [vmem:[#allocation5 + $0x78] sm:$0xff]
        %v310 = vld [vmem:[#allocation5 + $0x80] sm:$0xff]
        %v311 = vld [vmem:[#allocation5 + $0x88] sm:$0xff]
        %v312 = vld [vmem:[#allocation5 + $0x90] sm:$0xff]
        %v313 = vld [vmem:[#allocation5 + $0x98] sm:$0xff]
        %v314 = vld [vmem:[#allocation5 + $0xa0] sm:$0xff]
        %v315 = vld [vmem:[#allocation5 + $0xa8] sm:$0xff]
        %v316 = vld [vmem:[#allocation5 + $0xb0] sm:$0xff]
        %v317 = vld [vmem:[#allocation5 + $0xb8] sm:$0xff]
        %v318 = vld [vmem:[#allocation5 + $0xc0] sm:$0xff]
        %v319 = vld [vmem:[#allocation5 + $0xc8] sm:$0xff]
        %v320 = vld [vmem:[#allocation5 + $0xd0] sm:$0xff]
        %v321 = vld [vmem:[#allocation5 + $0xd8] sm:$0xff]
        %v322 = vld [vmem:[#allocation5 + $0xe0] sm:$0xff]
        %v323 = vld [vmem:[#allocation5 + $0xe8] sm:$0xff]
        %v324 = vld [vmem:[#allocation5 + $0xf0] sm:$0xff]
        %v325 = vld [vmem:[#allocation5 + $0xf8] sm:$0xff]
        %v326 = vld [vmem:[%s2] sm:$0x3]
        %v328 = vlaneseq
        %v329 = vshrl.u32 %v328, 7
        %v330 = vsub.s32 0, %v329
        %v331 = vrot.slane %v326, %v330
        %v332 = vlaneseq
        %v333 = vshrl.u32 %v332, 7
        %v334 = vsub.s32 1, %v333
        %v335 = vrot.slane %v326, %v334
        %338 = vmatprep.subr.mxu0 %v325
        %339 = vmatpush1.msra.mxu0 %v324
        %340 = vmatprep.subr.mxu0 %v323
        %341 = vmatpush1.msra.mxu0 %v322
        %342 = vmatprep.subr.mxu0 %v321
        %343 = vmatpush1.msra.mxu0 %v320
        %344 = vmatprep.subr.mxu0 %v319
        %345 = vmatpush1.msra.mxu0 %v318
        %346 = vmatprep.subr.mxu0 %v317
        %347 = vmatpush1.msra.mxu0 %v316
        %348 = vmatprep.subr.mxu0 %v315
        %349 = vmatpush1.msra.mxu0 %v314
        %350 = vmatprep.subr.mxu0 %v313
        %351 = vmatpush1.msra.mxu0 %v312
        %352 = vmatprep.subr.mxu0 %v311
        %353 = vmatpush1.msra.mxu0 %v310
        %354 = vmatprep.subr.mxu0 %v309
        %355 = vmatpush1.msra.mxu0 %v308
        %356 = vmatprep.subr.mxu0 %v307
        %357 = vmatpush1.msra.mxu0 %v306
        %358 = vmatprep.subr.mxu0 %v305
        %359 = vmatpush1.msra.mxu0 %v304
        %360 = vmatprep.subr.mxu0 %v303
        %361 = vmatpush1.msra.mxu0 %v302
        %362 = vmatprep.subr.mxu0 %v301
        %363 = vmatpush1.msra.mxu0 %v300
        %364 = vmatprep.subr.mxu0 %v299
        %365 = vmatpush1.msra.mxu0 %v298
        %366 = vmatprep.subr.mxu0 %v297
        %367 = vmatpush1.msra.mxu0 %v296
        %368 = vmatprep.subr.mxu0 %v295
        %369 = vmatpush1.msra.mxu0 %v294
        %370 = vmatprep.subr.mxu0 0.0
        %371 = vmatpush2.msra.mxu0 0.0
        %372 = vmatprep.subr.mxu0 0.0
        %373 = vmatpush2.msra.mxu0 0.0
        %374 = vmatprep.subr.mxu0 0.0
        %375 = vmatpush2.msra.mxu0 0.0
        %376 = vmatprep.subr.mxu0 0.0
        %377 = vmatpush2.msra.mxu0 0.0
        %378 = vmatprep.subr.mxu0 0.0
        %379 = vmatpush2.msra.mxu0 0.0
        %380 = vmatprep.subr.mxu0 0.0
        %381 = vmatpush2.msra.mxu0 0.0
        %382 = vmatprep.subr.mxu0 0.0
        %383 = vmatpush2.msra.mxu0 0.0
        %384 = vmatprep.subr.mxu0 0.0
        %385 = vmatpush2.msra.mxu0 0.0
        %386 = vmatprep.subr.mxu0 0.0
        %387 = vmatpush2.msra.mxu0 0.0
        %388 = vmatprep.subr.mxu0 0.0
        %389 = vmatpush2.msra.mxu0 0.0
        %390 = vmatprep.subr.mxu0 0.0
        %391 = vmatpush2.msra.mxu0 0.0
        %392 = vmatprep.subr.mxu0 0.0
        %393 = vmatpush2.msra.mxu0 0.0
        %394 = vmatprep.subr.mxu0 0.0
        %395 = vmatpush2.msra.mxu0 0.0
        %396 = vmatprep.subr.mxu0 0.0
        %397 = vmatpush2.msra.mxu0 0.0
        %398 = vmatprep.subr.mxu0 0.0
        %399 = vmatpush2.msra.mxu0 0.0
        %400 = vmatprep.subr.mxu0 0.0
        %401 = vmatpush2.msra.mxu0 0.0
        %402 = vmatprep.mubr.f32.mxu0 0.0
        %403 = vmatmul.mubr.f32.gmra.mxu0 %v274
        %v404 = vpop.f32.mrf.mxu0
        %v405 = vadd.f32 %v331, %v404
        %v406 = vpop.f32.mrf.mxu0
        %v407 = vadd.f32 %v335, %v406
        %408 = vmatprep.mubr.f32.mxu0 0.0
        %409 = vmatmul.mubr.f32.gmra.mxu0 %v275
        %v410 = vpop.f32.mrf.mxu0
        %v411 = vadd.f32 %v331, %v410
        %v412 = vpop.f32.mrf.mxu0
        %v413 = vadd.f32 %v335, %v412
        %414 = vmatprep.mubr.f32.mxu0 0.0
        %415 = vmatmul.mubr.f32.gmra.mxu0 %v276
        %v416 = vpop.f32.mrf.mxu0
        %v417 = vadd.f32 %v331, %v416
        %v418 = vpop.f32.mrf.mxu0
        %v419 = vadd.f32 %v335, %v418
        %420 = vmatprep.mubr.f32.mxu0 0.0
        %421 = vmatmul.mubr.f32.gmra.mxu0 %v277
        %v422 = vpop.f32.mrf.mxu0
        %v423 = vadd.f32 %v331, %v422
        %v424 = vpop.f32.mrf.mxu0
        %v425 = vadd.f32 %v335, %v424
        %426 = vmatprep.mubr.f32.mxu0 0.0
        %427 = vmatmul.mubr.f32.gmra.mxu0 %v278
        %v428 = vpop.f32.mrf.mxu0
        %v429 = vadd.f32 %v331, %v428
        %v430 = vpop.f32.mrf.mxu0
        %v431 = vadd.f32 %v335, %v430
        %432 = vmatprep.mubr.f32.mxu0 0.0
        %433 = vmatmul.mubr.f32.gmra.mxu0 %v279
        %v434 = vpop.f32.mrf.mxu0
        %v435 = vadd.f32 %v331, %v434
        %v436 = vpop.f32.mrf.mxu0
        %v437 = vadd.f32 %v335, %v436
        %438 = vmatprep.mubr.f32.mxu0 0.0
        %439 = vmatmul.mubr.f32.gmra.mxu0 %v280
        %v440 = vpop.f32.mrf.mxu0
        %v441 = vadd.f32 %v331, %v440
        %v442 = vpop.f32.mrf.mxu0
        %v443 = vadd.f32 %v335, %v442
        %444 = vmatprep.mubr.f32.mxu0 0.0
        %445 = vmatmul.mubr.f32.gmra.mxu0 %v281
        %v446 = vpop.f32.mrf.mxu0
        %v447 = vadd.f32 %v331, %v446
        %v448 = vpop.f32.mrf.mxu0
        %v449 = vadd.f32 %v335, %v448
        %450 = vmatprep.mubr.f32.mxu0 0.0
        %451 = vmatmul.mubr.f32.gmra.mxu0 %v282
        %v452 = vpop.f32.mrf.mxu0
        %v453 = vadd.f32 %v331, %v452
        %v454 = vpop.f32.mrf.mxu0
        %v455 = vadd.f32 %v335, %v454
        %456 = vmatprep.mubr.f32.mxu0 0.0
        %457 = vmatmul.mubr.f32.gmra.mxu0 %v283
        %v458 = vpop.f32.mrf.mxu0
        %v459 = vadd.f32 %v331, %v458
        %v460 = vpop.f32.mrf.mxu0
        %v461 = vadd.f32 %v335, %v460
        %462 = vmatprep.mubr.f32.mxu0 0.0
        %463 = vmatmul.mubr.f32.gmra.mxu0 %v284
        %v464 = vpop.f32.mrf.mxu0
        %v465 = vadd.f32 %v331, %v464
        %v466 = vpop.f32.mrf.mxu0
        %v467 = vadd.f32 %v335, %v466
        %468 = vmatprep.mubr.f32.mxu0 0.0
        %469 = vmatmul.mubr.f32.gmra.mxu0 %v285
        %v470 = vpop.f32.mrf.mxu0
        %v471 = vadd.f32 %v331, %v470
        %v472 = vpop.f32.mrf.mxu0
        %v473 = vadd.f32 %v335, %v472
        %474 = vmatprep.mubr.f32.mxu0 0.0
        %475 = vmatmul.mubr.f32.gmra.mxu0 %v286
        %v476 = vpop.f32.mrf.mxu0
        %v477 = vadd.f32 %v331, %v476
        %v478 = vpop.f32.mrf.mxu0
        %v479 = vadd.f32 %v335, %v478
        %480 = vmatprep.mubr.f32.mxu0 0.0
        %481 = vmatmul.mubr.f32.gmra.mxu0 %v287
        %v482 = vpop.f32.mrf.mxu0
        %v483 = vadd.f32 %v331, %v482
        %v484 = vpop.f32.mrf.mxu0
        %v485 = vadd.f32 %v335, %v484
        %486 = vmatprep.mubr.f32.mxu0 0.0
        %487 = vmatmul.mubr.f32.gmra.mxu0 %v288
        %v488 = vpop.f32.mrf.mxu0
        %v489 = vadd.f32 %v331, %v488
        %v490 = vpop.f32.mrf.mxu0
        %v491 = vadd.f32 %v335, %v490
        %492 = vmatprep.mubr.f32.mxu0 0.0
        %493 = vmatmul.mubr.f32.gmra.mxu0 %v289
        %v494 = vpop.f32.mrf.mxu0
        %v495 = vadd.f32 %v331, %v494
        %v496 = vpop.f32.mrf.mxu0
        %v497 = vadd.f32 %v335, %v496
        %498 = vmatprep.mubr.f32.mxu0 0.0
        %499 = vmatmul.mubr.f32.gmra.mxu0 %v290
        %v500 = vpop.f32.mrf.mxu0
        %v501 = vadd.f32 %v331, %v500
        %v502 = vpop.f32.mrf.mxu0
        %v503 = vadd.f32 %v335, %v502
        %504 = vmatprep.mubr.f32.mxu0 0.0
        %505 = vmatmul.mubr.f32.gmra.mxu0 %v291
        %v506 = vpop.f32.mrf.mxu0
        %v507 = vadd.f32 %v331, %v506
        %v508 = vpop.f32.mrf.mxu0
        %v509 = vadd.f32 %v335, %v508
        %510 = vmatprep.mubr.f32.mxu0 0.0
        %511 = vmatmul.mubr.f32.gmra.mxu0 %v292
        %v512 = vpop.f32.mrf.mxu0
        %v513 = vadd.f32 %v331, %v512
        %v514 = vpop.f32.mrf.mxu0
        %v515 = vadd.f32 %v335, %v514
        %516 = vmatprep.mubr.f32.mxu0 0.0
        %517 = vmatmul.mubr.f32.gmra.mxu0 %v293
        %v518 = vpop.f32.mrf.mxu0
        %v519 = vadd.f32 %v331, %v518
        %v520 = vpop.f32.mrf.mxu0
        %v521 = vadd.f32 %v335, %v520
        %522 = vdwg.mxu0
        %v523 = vmax.f32 %v405, 0.0
        %v524 = vmax.f32 %v407, 0.0
        %v525 = vmax.f32 %v411, 0.0
        %v526 = vmax.f32 %v413, 0.0
        %v527 = vmax.f32 %v417, 0.0
        %v528 = vmax.f32 %v419, 0.0
        %v529 = vmax.f32 %v423, 0.0
        %v530 = vmax.f32 %v425, 0.0
        %v531 = vmax.f32 %v429, 0.0
        %v532 = vmax.f32 %v431, 0.0
        %v533 = vmax.f32 %v435, 0.0
        %v534 = vmax.f32 %v437, 0.0
        %v535 = vmax.f32 %v441, 0.0
        %v536 = vmax.f32 %v443, 0.0
        %v537 = vmax.f32 %v447, 0.0
        %v538 = vmax.f32 %v449, 0.0
        %v539 = vmax.f32 %v453, 0.0
        %v540 = vmax.f32 %v455, 0.0
        %v541 = vmax.f32 %v459, 0.0
        %v542 = vmax.f32 %v461, 0.0
        %v543 = vmax.f32 %v465, 0.0
        %v544 = vmax.f32 %v467, 0.0
        %v545 = vmax.f32 %v471, 0.0
        %v546 = vmax.f32 %v473, 0.0
        %v547 = vmax.f32 %v477, 0.0
        %v548 = vmax.f32 %v479, 0.0
        %v549 = vmax.f32 %v483, 0.0
        %v550 = vmax.f32 %v485, 0.0
        %v551 = vmax.f32 %v489, 0.0
        %v552 = vmax.f32 %v491, 0.0
        %v553 = vmax.f32 %v495, 0.0
        %v554 = vmax.f32 %v497, 0.0
        %v555 = vmax.f32 %v501, 0.0
        %v556 = vmax.f32 %v503, 0.0
        %v557 = vmax.f32 %v507, 0.0
        %v558 = vmax.f32 %v509, 0.0
        %v559 = vmax.f32 %v513, 0.0
        %v560 = vmax.f32 %v515, 0.0
        %v561 = vmax.f32 %v519, 0.0
        %v562 = vmax.f32 %v521, 0.0
        %v563 = vld [vmem:[#allocation7] sm:$0xff]
        %v564 = vld [vmem:[#allocation7 + $0x8] sm:$0xff]
        %v565 = vld [vmem:[#allocation7 + $0x10] sm:$0xff]
        %v566 = vld [vmem:[#allocation7 + $0x18] sm:$0xff]
        %v567 = vld [vmem:[#allocation7 + $0x20] sm:$0xff]
        %v568 = vld [vmem:[#allocation7 + $0x28] sm:$0xff]
        %v569 = vld [vmem:[#allocation7 + $0x30] sm:$0xff]
        %v570 = vld [vmem:[#allocation7 + $0x38] sm:$0xff]
        %v571 = vld [vmem:[#allocation7 + $0x40] sm:$0xff]
        %v572 = vld [vmem:[#allocation7 + $0x48] sm:$0xff]
        %v573 = vld [vmem:[#allocation7 + $0x50] sm:$0xff]
        %v574 = vld [vmem:[#allocation7 + $0x58] sm:$0xff]
        %v575 = vld [vmem:[#allocation7 + $0x60] sm:$0xff]
        %v576 = vld [vmem:[#allocation7 + $0x68] sm:$0xff]
        %v577 = vld [vmem:[#allocation7 + $0x70] sm:$0xff]
        %v578 = vld [vmem:[#allocation7 + $0x78] sm:$0xff]
        %v579 = vld [vmem:[#allocation7 + $0x80] sm:$0xff]
        %v580 = vld [vmem:[#allocation7 + $0x88] sm:$0xff]
        %v581 = vld [vmem:[#allocation7 + $0x90] sm:$0xff]
        %v582 = vld [vmem:[#allocation7 + $0x98] sm:$0xff]
        %v583 = vld [vmem:[#allocation7 + $0xa0] sm:$0xff]
        %v584 = vld [vmem:[#allocation7 + $0xa8] sm:$0xff]
        %v585 = vld [vmem:[#allocation7 + $0xb0] sm:$0xff]
        %v586 = vld [vmem:[#allocation7 + $0xb8] sm:$0xff]
        %v587 = vld [vmem:[#allocation7 + $0xc0] sm:$0xff]
        %v588 = vld [vmem:[#allocation7 + $0xc8] sm:$0xff]
        %v589 = vld [vmem:[#allocation7 + $0xd0] sm:$0xff]
        %v590 = vld [vmem:[#allocation7 + $0xd8] sm:$0xff]
        %v591 = vld [vmem:[#allocation7 + $0xe0] sm:$0xff]
        %v592 = vld [vmem:[#allocation7 + $0xe8] sm:$0xff]
        %v593 = vld [vmem:[#allocation7 + $0xf0] sm:$0xff]
        %v594 = vld [vmem:[#allocation7 + $0xf8] sm:$0xff]
        %v595 = vld [vmem:[#allocation7 + $0x100] sm:$0xff]
        %v596 = vld [vmem:[#allocation7 + $0x108] sm:$0xff]
        %v597 = vld [vmem:[#allocation7 + $0x110] sm:$0xff]
        %v598 = vld [vmem:[#allocation7 + $0x118] sm:$0xff]
        %v599 = vld [vmem:[#allocation7 + $0x120] sm:$0xff]
        %v600 = vld [vmem:[#allocation7 + $0x128] sm:$0xff]
        %v601 = vld [vmem:[#allocation7 + $0x130] sm:$0xff]
        %v602 = vld [vmem:[#allocation7 + $0x138] sm:$0xff]
        %v603 = vld [vmem:[#allocation7 + $0x140] sm:$0xff]
        %v604 = vld [vmem:[#allocation7 + $0x148] sm:$0xff]
        %v605 = vld [vmem:[#allocation7 + $0x150] sm:$0xff]
        %v606 = vld [vmem:[#allocation7 + $0x158] sm:$0xff]
        %v607 = vld [vmem:[#allocation7 + $0x160] sm:$0xff]
        %v608 = vld [vmem:[#allocation7 + $0x168] sm:$0xff]
        %v609 = vld [vmem:[#allocation7 + $0x170] sm:$0xff]
        %v610 = vld [vmem:[#allocation7 + $0x178] sm:$0xff]
        %v611 = vld [vmem:[#allocation7 + $0x180] sm:$0xff]
        %v612 = vld [vmem:[#allocation7 + $0x188] sm:$0xff]
        %v613 = vld [vmem:[#allocation7 + $0x190] sm:$0xff]
        %v614 = vld [vmem:[#allocation7 + $0x198] sm:$0xff]
        %v615 = vld [vmem:[#allocation7 + $0x1a0] sm:$0xff]
        %v616 = vld [vmem:[#allocation7 + $0x1a8] sm:$0xff]
        %v617 = vld [vmem:[#allocation7 + $0x1b0] sm:$0xff]
        %v618 = vld [vmem:[#allocation7 + $0x1b8] sm:$0xff]
        %v619 = vld [vmem:[#allocation7 + $0x1c0] sm:$0xff]
        %v620 = vld [vmem:[#allocation7 + $0x1c8] sm:$0xff]
        %v621 = vld [vmem:[#allocation7 + $0x1d0] sm:$0xff]
        %v622 = vld [vmem:[#allocation7 + $0x1d8] sm:$0xff]
        %v623 = vld [vmem:[#allocation7 + $0x1e0] sm:$0xff]
        %v624 = vld [vmem:[#allocation7 + $0x1e8] sm:$0xff]
        %v625 = vld [vmem:[#allocation7 + $0x1f0] sm:$0xff]
        %v626 = vld [vmem:[#allocation7 + $0x1f8] sm:$0xff]
        %v627 = vld [vmem:[%s4] sm:$0x3]
        %v629 = vlaneseq
        %v630 = vshrl.u32 %v629, 7
        %v631 = vsub.s32 0, %v630
        %v632 = vrot.slane %v627, %v631
        %v633 = vlaneseq
        %v634 = vshrl.u32 %v633, 7
        %v635 = vsub.s32 1, %v634
        %v636 = vrot.slane %v627, %v635
        %639 = vmatprep.subr.mxu0 %v594
        %640 = vmatpush1.msra.mxu0 %v593
        %641 = vmatprep.subr.mxu0 %v592
        %642 = vmatpush1.msra.mxu0 %v591
        %643 = vmatprep.subr.mxu0 %v590
        %644 = vmatpush1.msra.mxu0 %v589
        %645 = vmatprep.subr.mxu0 %v588
        %646 = vmatpush1.msra.mxu0 %v587
        %647 = vmatprep.subr.mxu0 %v586
        %648 = vmatpush1.msra.mxu0 %v585
        %649 = vmatprep.subr.mxu0 %v584
        %650 = vmatpush1.msra.mxu0 %v583
        %651 = vmatprep.subr.mxu0 %v582
        %652 = vmatpush1.msra.mxu0 %v581
        %653 = vmatprep.subr.mxu0 %v580
        %654 = vmatpush1.msra.mxu0 %v579
        %655 = vmatprep.subr.mxu0 %v578
        %656 = vmatpush1.msra.mxu0 %v577
        %657 = vmatprep.subr.mxu0 %v576
        %658 = vmatpush1.msra.mxu0 %v575
        %659 = vmatprep.subr.mxu0 %v574
        %660 = vmatpush1.msra.mxu0 %v573
        %661 = vmatprep.subr.mxu0 %v572
        %662 = vmatpush1.msra.mxu0 %v571
        %663 = vmatprep.subr.mxu0 %v570
        %664 = vmatpush1.msra.mxu0 %v569
        %665 = vmatprep.subr.mxu0 %v568
        %666 = vmatpush1.msra.mxu0 %v567
        %667 = vmatprep.subr.mxu0 %v566
        %668 = vmatpush1.msra.mxu0 %v565
        %669 = vmatprep.subr.mxu0 %v564
        %670 = vmatpush1.msra.mxu0 %v563
        %671 = vmatprep.subr.mxu0 %v626
        %672 = vmatpush2.msra.mxu0 %v625
        %673 = vmatprep.subr.mxu0 %v624
        %674 = vmatpush2.msra.mxu0 %v623
        %675 = vmatprep.subr.mxu0 %v622
        %676 = vmatpush2.msra.mxu0 %v621
        %677 = vmatprep.subr.mxu0 %v620
        %678 = vmatpush2.msra.mxu0 %v619
        %679 = vmatprep.subr.mxu0 %v618
        %680 = vmatpush2.msra.mxu0 %v617
        %681 = vmatprep.subr.mxu0 %v616
        %682 = vmatpush2.msra.mxu0 %v615
        %683 = vmatprep.subr.mxu0 %v614
        %684 = vmatpush2.msra.mxu0 %v613
        %685 = vmatprep.subr.mxu0 %v612
        %686 = vmatpush2.msra.mxu0 %v611
        %687 = vmatprep.subr.mxu0 %v610
        %688 = vmatpush2.msra.mxu0 %v609
        %689 = vmatprep.subr.mxu0 %v608
        %690 = vmatpush2.msra.mxu0 %v607
        %691 = vmatprep.subr.mxu0 %v606
        %692 = vmatpush2.msra.mxu0 %v605
        %693 = vmatprep.subr.mxu0 %v604
        %694 = vmatpush2.msra.mxu0 %v603
        %695 = vmatprep.subr.mxu0 %v602
        %696 = vmatpush2.msra.mxu0 %v601
        %697 = vmatprep.subr.mxu0 %v600
        %698 = vmatpush2.msra.mxu0 %v599
        %699 = vmatprep.subr.mxu0 %v598
        %700 = vmatpush2.msra.mxu0 %v597
        %701 = vmatprep.subr.mxu0 %v596
        %702 = vmatpush2.msra.mxu0 %v595
        %703 = vmatprep.mubr.f32.mxu0 %v524
        %704 = vmatmul.mubr.f32.gmra.mxu0 %v523
        %v705 = vpop.f32.mrf.mxu0
        %v706 = vadd.f32 %v632, %v705
        %v707 = vpop.f32.mrf.mxu0
        %v708 = vadd.f32 %v636, %v707
        %709 = vmatprep.mubr.f32.mxu0 %v526
        %710 = vmatmul.mubr.f32.gmra.mxu0 %v525
        %v711 = vpop.f32.mrf.mxu0
        %v712 = vadd.f32 %v632, %v711
        %v713 = vpop.f32.mrf.mxu0
        %v714 = vadd.f32 %v636, %v713
        %715 = vmatprep.mubr.f32.mxu0 %v528
        %716 = vmatmul.mubr.f32.gmra.mxu0 %v527
        %v717 = vpop.f32.mrf.mxu0
        %v718 = vadd.f32 %v632, %v717
        %v719 = vpop.f32.mrf.mxu0
        %v720 = vadd.f32 %v636, %v719
        %721 = vmatprep.mubr.f32.mxu0 %v530
        %722 = vmatmul.mubr.f32.gmra.mxu0 %v529
        %v723 = vpop.f32.mrf.mxu0
        %v724 = vadd.f32 %v632, %v723
        %v725 = vpop.f32.mrf.mxu0
        %v726 = vadd.f32 %v636, %v725
        %727 = vmatprep.mubr.f32.mxu0 %v532
        %728 = vmatmul.mubr.f32.gmra.mxu0 %v531
        %v729 = vpop.f32.mrf.mxu0
        %v730 = vadd.f32 %v632, %v729
        %v731 = vpop.f32.mrf.mxu0
        %v732 = vadd.f32 %v636, %v731
        %733 = vmatprep.mubr.f32.mxu0 %v534
        %734 = vmatmul.mubr.f32.gmra.mxu0 %v533
        %v735 = vpop.f32.mrf.mxu0
        %v736 = vadd.f32 %v632, %v735
        %v737 = vpop.f32.mrf.mxu0
        %v738 = vadd.f32 %v636, %v737
        %739 = vmatprep.mubr.f32.mxu0 %v536
        %740 = vmatmul.mubr.f32.gmra.mxu0 %v535
        %v741 = vpop.f32.mrf.mxu0
        %v742 = vadd.f32 %v632, %v741
        %v743 = vpop.f32.mrf.mxu0
        %v744 = vadd.f32 %v636, %v743
        %745 = vmatprep.mubr.f32.mxu0 %v538
        %746 = vmatmul.mubr.f32.gmra.mxu0 %v537
        %v747 = vpop.f32.mrf.mxu0
        %v748 = vadd.f32 %v632, %v747
        %v749 = vpop.f32.mrf.mxu0
        %v750 = vadd.f32 %v636, %v749
        %751 = vmatprep.mubr.f32.mxu0 %v540
        %752 = vmatmul.mubr.f32.gmra.mxu0 %v539
        %v753 = vpop.f32.mrf.mxu0
        %v754 = vadd.f32 %v632, %v753
        %v755 = vpop.f32.mrf.mxu0
        %v756 = vadd.f32 %v636, %v755
        %757 = vmatprep.mubr.f32.mxu0 %v542
        %758 = vmatmul.mubr.f32.gmra.mxu0 %v541
        %v759 = vpop.f32.mrf.mxu0
        %v760 = vadd.f32 %v632, %v759
        %v761 = vpop.f32.mrf.mxu0
        %v762 = vadd.f32 %v636, %v761
        %763 = vmatprep.mubr.f32.mxu0 %v544
        %764 = vmatmul.mubr.f32.gmra.mxu0 %v543
        %v765 = vpop.f32.mrf.mxu0
        %v766 = vadd.f32 %v632, %v765
        %v767 = vpop.f32.mrf.mxu0
        %v768 = vadd.f32 %v636, %v767
        %769 = vmatprep.mubr.f32.mxu0 %v546
        %770 = vmatmul.mubr.f32.gmra.mxu0 %v545
        %v771 = vpop.f32.mrf.mxu0
        %v772 = vadd.f32 %v632, %v771
        %v773 = vpop.f32.mrf.mxu0
        %v774 = vadd.f32 %v636, %v773
        %775 = vmatprep.mubr.f32.mxu0 %v548
        %776 = vmatmul.mubr.f32.gmra.mxu0 %v547
        %v777 = vpop.f32.mrf.mxu0
        %v778 = vadd.f32 %v632, %v777
        %v779 = vpop.f32.mrf.mxu0
        %v780 = vadd.f32 %v636, %v779
        %781 = vmatprep.mubr.f32.mxu0 %v550
        %782 = vmatmul.mubr.f32.gmra.mxu0 %v549
        %v783 = vpop.f32.mrf.mxu0
        %v784 = vadd.f32 %v632, %v783
        %v785 = vpop.f32.mrf.mxu0
        %v786 = vadd.f32 %v636, %v785
        %787 = vmatprep.mubr.f32.mxu0 %v552
        %788 = vmatmul.mubr.f32.gmra.mxu0 %v551
        %v789 = vpop.f32.mrf.mxu0
        %v790 = vadd.f32 %v632, %v789
        %v791 = vpop.f32.mrf.mxu0
        %v792 = vadd.f32 %v636, %v791
        %793 = vmatprep.mubr.f32.mxu0 %v554
        %794 = vmatmul.mubr.f32.gmra.mxu0 %v553
        %v795 = vpop.f32.mrf.mxu0
        %v796 = vadd.f32 %v632, %v795
        %v797 = vpop.f32.mrf.mxu0
        %v798 = vadd.f32 %v636, %v797
        %799 = vmatprep.mubr.f32.mxu0 %v556
        %800 = vmatmul.mubr.f32.gmra.mxu0 %v555
        %v801 = vpop.f32.mrf.mxu0
        %v802 = vadd.f32 %v632, %v801
        %v803 = vpop.f32.mrf.mxu0
        %v804 = vadd.f32 %v636, %v803
        %805 = vmatprep.mubr.f32.mxu0 %v558
        %806 = vmatmul.mubr.f32.gmra.mxu0 %v557
        %v807 = vpop.f32.mrf.mxu0
        %v808 = vadd.f32 %v632, %v807
        %v809 = vpop.f32.mrf.mxu0
        %v810 = vadd.f32 %v636, %v809
        %811 = vmatprep.mubr.f32.mxu0 %v560
        %812 = vmatmul.mubr.f32.gmra.mxu0 %v559
        %v813 = vpop.f32.mrf.mxu0
        %v814 = vadd.f32 %v632, %v813
        %v815 = vpop.f32.mrf.mxu0
        %v816 = vadd.f32 %v636, %v815
        %817 = vmatprep.mubr.f32.mxu0 %v562
        %818 = vmatmul.mubr.f32.gmra.mxu0 %v561
        %v819 = vpop.f32.mrf.mxu0
        %v820 = vadd.f32 %v632, %v819
        %v821 = vpop.f32.mrf.mxu0
        %v822 = vadd.f32 %v636, %v821
        %823 = vdwg.mxu0
        %824 = vst [vmem:[%s271] sm:$0xff] %v706
        %825 = vst [vmem:[%s271 + $0x8] sm:$0xff] %v708
        %826 = vst [vmem:[%s271 + $0x10] sm:$0xff] %v712
        %827 = vst [vmem:[%s271 + $0x18] sm:$0xff] %v714
        %828 = vst [vmem:[%s271 + $0x20] sm:$0xff] %v718
        %829 = vst [vmem:[%s271 + $0x28] sm:$0xff] %v720
        %830 = vst [vmem:[%s271 + $0x30] sm:$0xff] %v724
        %831 = vst [vmem:[%s271 + $0x38] sm:$0xff] %v726
        %832 = vst [vmem:[%s271 + $0x40] sm:$0xff] %v730
        %833 = vst [vmem:[%s271 + $0x48] sm:$0xff] %v732
        %834 = vst [vmem:[%s271 + $0x50] sm:$0xff] %v736
        %835 = vst [vmem:[%s271 + $0x58] sm:$0xff] %v738
        %836 = vst [vmem:[%s271 + $0x60] sm:$0xff] %v742
        %837 = vst [vmem:[%s271 + $0x68] sm:$0xff] %v744
        %838 = vst [vmem:[%s271 + $0x70] sm:$0xff] %v748
        %839 = vst [vmem:[%s271 + $0x78] sm:$0xff] %v750
        %840 = vst [vmem:[%s271 + $0x80] sm:$0xff] %v754
        %841 = vst [vmem:[%s271 + $0x88] sm:$0xff] %v756
        %842 = vst [vmem:[%s271 + $0x90] sm:$0xff] %v760
        %843 = vst [vmem:[%s271 + $0x98] sm:$0xff] %v762
        %844 = vst [vmem:[%s271 + $0xa0] sm:$0xff] %v766
        %845 = vst [vmem:[%s271 + $0xa8] sm:$0xff] %v768
        %846 = vst [vmem:[%s271 + $0xb0] sm:$0xff] %v772
        %847 = vst [vmem:[%s271 + $0xb8] sm:$0xff] %v774
        %848 = vst [vmem:[%s271 + $0xc0] sm:$0xff] %v778
        %849 = vst [vmem:[%s271 + $0xc8] sm:$0xff] %v780
        %850 = vst [vmem:[%s271 + $0xd0] sm:$0xff] %v784
        %851 = vst [vmem:[%s271 + $0xd8] sm:$0xff] %v786
        %852 = vst [vmem:[%s271 + $0xe0] sm:$0xff] %v790
        %853 = vst [vmem:[%s271 + $0xe8] sm:$0xff] %v792
        %854 = vst [vmem:[%s271 + $0xf0] sm:$0xff] %v796
        %855 = vst [vmem:[%s271 + $0xf8] sm:$0xff] %v798
        %856 = vst [vmem:[%s271 + $0x100] sm:$0xff] %v802
        %857 = vst [vmem:[%s271 + $0x108] sm:$0xff] %v804
        %858 = vst [vmem:[%s271 + $0x110] sm:$0xff] %v808
        %859 = vst [vmem:[%s271 + $0x118] sm:$0xff] %v810
        %860 = vst [vmem:[%s271 + $0x120] sm:$0xff] %v814
        %861 = vst [vmem:[%s271 + $0x128] sm:$0xff] %v816
        %862 = vst [vmem:[%s271 + $0x130] sm:$0xff] %v820
        %863 = vst [vmem:[%s271 + $0x138] sm:$0xff] %v822
        %s864 = sand.u32 %s141, 1
        %s865 = scalar_lea.sflag [#allocation4], %s864
        %s866 = sand.u32 %s141, 1
        %s867 = smul.addr %s866, 320
        %s868 = scalar_lea.vmem [#allocation8], %s867
        // Predicated region
        $region53: #{tpu_custom_call.1} parent=39 // pred_check
          %p869 = pneg %p151
        $region54: #{tpu_custom_call.1} parent=39 // pred_check_branch
          %871 = sbr.rel (%p869) target = $region56
        $region55: #{tpu_custom_call.1} parent=39 // pred_region
          %s872 = smul.u32 20, %s23
          %s874 = ssub.s32 5120, 5120
          %875 = vsyncadd %s865, %s874
          %s876 = smul.addr %s872, 2
          %s877 = smul.addr %s876, 128
          %s878 = scalar_lea.hbm %s5, %s877
          %s879 = sshll.u32 %s868, 4
          %s880 = int_to_ptr.vmem [resolvable:$true] %s879
          %885 = dma.vmem_to_hbm [thread:$0]  %s880, 5120, %s878, %s865, 256, 256, 16
        $region56: #{tpu_custom_call.1} parent=39 // pred_fallthru
          _
      $region40: #{tpu_custom_call.1} parent=5 // pred_fallthru
        _
      %p886 = scmp.le.s32.totalorder 2, %s18
      // Predicated region
      $region57: #{tpu_custom_call.1} parent=5 // pred_check
        %p887 = pneg %p886
      $region58: #{tpu_custom_call.1} parent=5 // pred_check_branch
        %889 = sbr.rel (%p887) target = $region60
      $region59: #{tpu_custom_call.1} parent=5 // pred_region
        %s890 = ssub.s32 %s18, 2
        // Predicated region
        $region61: #{tpu_custom_call.1} parent=59 // pred_check
          %p891 = pneg %p157
        $region62: #{tpu_custom_call.1} parent=59 // pred_check_branch
          %893 = sbr.rel (%p891) target = $region64
        $region63: #{tpu_custom_call.1} parent=59 // pred_region
          %s894 = sand.u32 %s142, 1
          %s895 = scalar_lea.sflag [#allocation4], %s894
          %s896 = sand.u32 %s142, 1
          %s897 = smul.addr %s896, 320
          %s898 = scalar_lea.vmem [#allocation8], %s897
          %899 = dma.done %s895, 5120
        $region64: #{tpu_custom_call.1} parent=59 // pred_fallthru
          _
      $region60: #{tpu_custom_call.1} parent=5 // pred_fallthru
        _
    $region6: #{tpu_custom_call.1} parent=1 // loop_footer
      %s22 = sadd.s32 1, %s18
    $region7: #{tpu_custom_call.1} parent=1 // loop_footer_branch
      %17 = sbr.rel target = $region3
    $region8: #{tpu_custom_call.1} parent=1 // loop_exit
      _
    %900 = vsyncpa [#allocation3], 1
    %s901 = scalar_lea.sflag [#allocation3], 1
    %902 = vsyncpa %s901, 1
    %903 = vsyncpa [#allocation6], 1
    %904 = vsyncpa [#allocation4], 1
    %s905 = scalar_lea.sflag [#allocation4], 1
    %906 = vsyncpa %s905, 1

</llo_original>
